<compile_context>
chip_gen: v7x
topology: tpu7x:2x2x1
jax: 0.10.0
libtpu: 0.0.40
codegen_flags: <defaults>
</compile_context>

<pallas_src>
import functools

import jax
import jax.numpy as jnp
from jax.experimental import pallas as pl
from jax.experimental.pallas import tpu as pltpu

_MIB = 1024 * 1024


def _round_up(x: int, m: int) -> int:
    return ((x + m - 1) // m) * m


def _vmem_capacity_bytes() -> int:
    """Physical VMEM per core, with a conservative fallback (v7x: 64 MiB)."""
    try:
        cap = int(pltpu.get_tpu_info().vmem_capacity_bytes)
        if cap > 0:
            return cap
    except Exception:
        pass
    return 64 * _MIB


def _vmem_limit_bytes(cap: int, block_bytes: int) -> int:
    # 2x double-buffered input + 2x output blocks + f32 temporaries/slack.
    need = 6 * block_bytes + 2 * _MIB
    return int(min(int(0.9 * cap), max(32 * _MIB, need)))


# ---------------------------------------------------------------------------
# Single-pass fused kernel (x resident in VMEM).
# ---------------------------------------------------------------------------
def _fused_kernel(x_ref, o_ref, *, mode: str, scale: float, n_rows: int):
    x = x_ref[...].astype(jnp.float32)
    col_mean = jnp.sum(x, axis=0, keepdims=True) * (1.0 / n_rows)   # (1, D)
    if mode == "PN":
        xc = x - col_mean
        mean_sq = jnp.sum(xc * xc) * (1.0 / n_rows)                  # scalar
        out = xc * (scale * jax.lax.rsqrt(1e-6 + mean_sq))
    elif mode == "PN-SI":
        xc = x - col_mean
        inv = jax.lax.rsqrt(1e-6 + jnp.sum(xc * xc, axis=1, keepdims=True))
        out = xc * (scale * inv)
    else:  # "PN-SCS"
        inv = jax.lax.rsqrt(1e-6 + jnp.sum(x * x, axis=1, keepdims=True))
        out = x * (scale * inv) - col_mean
    o_ref[...] = out.astype(o_ref.dtype)


# ---------------------------------------------------------------------------
# Two-pass streaming path.
# ---------------------------------------------------------------------------
def _col_sum_kernel(x_ref, sum_ref, *, n_rows, tile_rows, mask_tail):
    i = pl.program_id(0)

    @pl.when(i == 0)
    def _():
        sum_ref[...] = jnp.zeros_like(sum_ref)

    x = x_ref[...].astype(jnp.float32)
    if mask_tail:
        row = jax.lax.broadcasted_iota(jnp.int32, x.shape, 0) + i * tile_rows
        x = jnp.where(row < n_rows, x, 0.0)
    sum_ref[...] += jnp.sum(x, axis=0, keepdims=True)


def _col_sum_sq_kernel(x_ref, sum_ref, sumsq_ref, *, n_rows, tile_rows,
                       mask_tail):
    i = pl.program_id(0)

    @pl.when(i == 0)
    def _():
        sum_ref[...] = jnp.zeros_like(sum_ref)
        sumsq_ref[...] = jnp.zeros_like(sumsq_ref)

    x = x_ref[...].astype(jnp.float32)
    if mask_tail:
        row = jax.lax.broadcasted_iota(jnp.int32, x.shape, 0) + i * tile_rows
        x = jnp.where(row < n_rows, x, 0.0)
    sum_ref[...] += jnp.sum(x, axis=0, keepdims=True)
    sumsq_ref[...] += jnp.sum(x * x, axis=0, keepdims=True)


def _apply_pn_kernel(mean_ref, fac_ref, x_ref, o_ref):
    # (x - col_mean) * (scale / rownorm_mean); scalar factor lives in SMEM.
    x = x_ref[...].astype(jnp.float32)
    o_ref[...] = ((x - mean_ref[...]) * fac_ref[0, 0]).astype(o_ref.dtype)


def _apply_rowwise_kernel(mean_ref, x_ref, o_ref, *, mode: str, scale: float):
    x = x_ref[...].astype(jnp.float32)
    if mode == "PN-SI":
        xc = x - mean_ref[...]
        inv = jax.lax.rsqrt(1e-6 + jnp.sum(xc * xc, axis=1, keepdims=True))
        out = xc * (scale * inv)
    else:  # "PN-SCS"
        inv = jax.lax.rsqrt(1e-6 + jnp.sum(x * x, axis=1, keepdims=True))
        out = x * (scale * inv) - mean_ref[...]
    o_ref[...] = out.astype(o_ref.dtype)


# ---------------------------------------------------------------------------
# Public wrapper.
# ---------------------------------------------------------------------------
def pairnorm(x: jax.Array, mode: str = "PN", scale: float = 1.0, *,
             block_rows: int | None = None,
             force_two_pass: bool = False) -> jax.Array:
    """Pallas-TPU PairNorm forward. x: (N, D)."""
    assert mode in ["None", "PN", "PN-SI", "PN-SCS"]
    if mode == "None":
        return x

    n, d = x.shape
    scale = float(scale)
    vmem_cap = _vmem_capacity_bytes()
    itemsize = jnp.dtype(x.dtype).itemsize
    sub = {4: 8, 2: 16, 1: 32}.get(itemsize, 8)

    # ---- Fast path: whole x resident in VMEM, single HBM read + write. ----
    x_f32_bytes = n * d * 4
    single_pass_budget = min(vmem_cap // 6, 16 * _MIB)
    if (not force_two_pass) and x_f32_bytes <= single_pass_budget:
        return pl.pallas_call(
            functools.partial(_fused_kernel, mode=mode, scale=scale, n_rows=n),
            out_shape=jax.ShapeDtypeStruct((n, d), x.dtype),
            compiler_params=pltpu.CompilerParams(
                vmem_limit_bytes=_vmem_limit_bytes(vmem_cap, x_f32_bytes)),
        )(x)

    # ---- Two-pass streaming path. ----
    if block_rows is None:
        target_bytes = 4 * _MIB                       # ~roofline-saturating
        max_block = max(1 * _MIB, (vmem_cap * 2 // 5) // 4)
        bb = min(target_bytes, max_block)
        tile_n = max(sub, (bb // (d * 4)) // sub * sub)
    else:
        tile_n = max(sub, (int(block_rows) // sub) * sub)
    tile_n = min(tile_n, _round_up(n, sub))
    grid_rows = pl.cdiv(n, tile_n)
    mask_tail = (n % tile_n) != 0
    block_bytes = tile_n * d * 4
    vmem_limit = _vmem_limit_bytes(vmem_cap, block_bytes)

    x_spec = pl.BlockSpec((tile_n, d), lambda i: (i, 0))
    stat_spec = pl.BlockSpec((1, d), lambda i: (0, 0))

    # Pass 1: global column statistics (resident accumulators).
    if mode == "PN":
        col_sum, col_sumsq = pl.pallas_call(
            functools.partial(_col_sum_sq_kernel, n_rows=n, tile_rows=tile_n,
                              mask_tail=mask_tail),
            out_shape=(jax.ShapeDtypeStruct((1, d), jnp.float32),
                       jax.ShapeDtypeStruct((1, d), jnp.float32)),
            grid=(grid_rows,),
            in_specs=[x_spec],
            out_specs=(stat_spec, stat_spec),
            compiler_params=pltpu.CompilerParams(
                dimension_semantics=("arbitrary",),
                vmem_limit_bytes=vmem_limit),
        )(x)
    else:
        col_sum = pl.pallas_call(
            functools.partial(_col_sum_kernel, n_rows=n, tile_rows=tile_n,
                              mask_tail=mask_tail),
            out_shape=jax.ShapeDtypeStruct((1, d), jnp.float32),
            grid=(grid_rows,),
            in_specs=[x_spec],
            out_specs=stat_spec,
            compiler_params=pltpu.CompilerParams(
                dimension_semantics=("arbitrary",),
                vmem_limit_bytes=vmem_limit),
        )(x)

    # Tiny (D,)-sized glue in XLA.
    col_mean = (col_sum * (1.0 / n)).astype(jnp.float32)           # (1, D)

    # Pass 2: row-parallel apply (pipelined, megacore-friendly).
    if mode == "PN":
        # sum_ij (x - mean)^2 == sum_j sumsq_j - n * sum_j mean_j^2
        tot = jnp.maximum(
            jnp.sum(col_sumsq) - n * jnp.sum(col_mean * col_mean), 0.0)
        fac = (scale * jax.lax.rsqrt(1e-6 + tot * (1.0 / n)))
        fac = jnp.reshape(fac, (1, 1)).astype(jnp.float32)
        out = pl.pallas_call(
            _apply_pn_kernel,
            out_shape=jax.ShapeDtypeStruct((n, d), x.dtype),
            grid=(grid_rows,),
            in_specs=[
                stat_spec,                                          # col_mean
                pl.BlockSpec(memory_space=pltpu.MemorySpace.SMEM),  # scalar
                x_spec,                                             # x tile
            ],
            out_specs=x_spec,
            compiler_params=pltpu.CompilerParams(
                dimension_semantics=("parallel",),
                vmem_limit_bytes=vmem_limit),
        )(col_mean, fac, x)
    else:
        out = pl.pallas_call(
            functools.partial(_apply_rowwise_kernel, mode=mode, scale=scale),
            out_shape=jax.ShapeDtypeStruct((n, d), x.dtype),
            grid=(grid_rows,),
            in_specs=[stat_spec, x_spec],
            out_specs=x_spec,
            compiler_params=pltpu.CompilerParams(
                dimension_semantics=("parallel",),
                vmem_limit_bytes=vmem_limit),
        )(col_mean, x)

    return out


# ---------------------------------------------------------------------------
# Pure-JAX reference mirroring the PyTorch module.
# ---------------------------------------------------------------------------
def _pairnorm_ref(x, mode="PN", scale=1.0):
    if mode == "None":
        return x
    col_mean = x.mean(axis=0)
    if mode == "PN":
        xc = x - col_mean
        rownorm_mean = jnp.sqrt(1e-6 + (xc ** 2).sum(axis=1).mean())
        return scale * xc / rownorm_mean
    if mode == "PN-SI":
        xc = x - col_mean
        rn = jnp.sqrt(1e-6 + (xc ** 2).sum(axis=1, keepdims=True))
        return scale * xc / rn
    rn = jnp.sqrt(1e-6 + (x ** 2).sum(axis=1, keepdims=True))
    return scale * x / rn - col_mean


if __name__ == "__main__":
    key = jax.random.PRNGKey(0)
    ok = True
    cases = [
        ((256, 128), 1.0),   # lane-dense D
        ((200, 96), 2.5),    # ragged N (tail-mask path), D < 128, scale != 1
    ]
    for idx, (shape, scale) in enumerate(cases):
        x = jax.random.normal(jax.random.fold_in(key, idx), shape,
                              dtype=jnp.float32)
        for mode in ["None", "PN", "PN-SI", "PN-SCS"]:
            y_ref = _pairnorm_ref(x, mode=mode, scale=scale)
            for kwargs in ({},                                    # fused path
                           {"force_two_pass": True, "block_rows": 64}):
                y = jax.block_until_ready(
                    pairnorm(x, mode=mode, scale=scale, **kwargs))
                if y.shape != y_ref.shape or not bool(
                        jnp.allclose(y, y_ref, atol=1e-4, rtol=1e-4)):
                    ok = False
                    print(f"MISMATCH shape={shape} scale={scale} "
                          f"mode={mode} kwargs={kwargs}")
    if ok:
        print("KERNEL_OK")
</pallas_src>

<mosaic_0001>
module attributes {stable_mosaic.version = 11 : i64} {
  func.func @_fused_kernel(%arg0: memref<256x128xf32, #tpu.memory_space<vmem>>, %arg1: memref<256x128xf32, #tpu.memory_space<vmem>>) attributes {dimension_semantics = [], scalar_prefetch = 0 : i64, scratch_operands = 0 : i64, tpu.core_type = #tpu.core_type<tc>} {
    %c0 = arith.constant 0 : index
    %c0_0 = arith.constant 0 : index
    %0 = vector.load %arg0[%c0, %c0_0] : memref<256x128xf32, #tpu.memory_space<vmem>>, vector<256x128xf32>
    %cst = arith.constant dense<0.000000e+00> : vector<128xf32>
    %1 = vector.multi_reduction <add>, %0, %cst [0] : vector<256x128xf32> to vector<128xf32>
    %2 = vector.shape_cast %1 : vector<128xf32> to vector<1x128xf32>
    %cst_1 = arith.constant 3.906250e-03 : f32
    %3 = vector.broadcast %cst_1 : f32 to vector<1x128xf32>
    %4 = arith.mulf %2, %3 : vector<1x128xf32>
    %5 = vector.broadcast %4 : vector<1x128xf32> to vector<256x128xf32>
    %6 = arith.subf %0, %5 : vector<256x128xf32>
    %7 = arith.mulf %6, %6 : vector<256x128xf32>
    %8 = vector.shape_cast %7 : vector<256x128xf32> to vector<1x256x128xf32>
    %cst_2 = arith.constant dense<0.000000e+00> : vector<1xf32>
    %9 = vector.multi_reduction <add>, %8, %cst_2 [1, 2] : vector<1x256x128xf32> to vector<1xf32>
    %10 = vector.shape_cast %9 : vector<1xf32> to vector<1x1x1xf32>
    %11 = vector.extract %10[0, 0, 0] : f32 from vector<1x1x1xf32>
    %cst_3 = arith.constant 3.906250e-03 : f32
    %12 = arith.mulf %11, %cst_3 : f32
    %cst_4 = arith.constant 9.99999997E-7 : f32
    %13 = arith.addf %cst_4, %12 : f32
    %14 = math.rsqrt %13 : f32
    %cst_5 = arith.constant 1.000000e+00 : f32
    %15 = arith.mulf %cst_5, %14 : f32
    %16 = vector.broadcast %15 : f32 to vector<256x128xf32>
    %17 = arith.mulf %6, %16 : vector<256x128xf32>
    %c0_6 = arith.constant 0 : index
    %c0_7 = arith.constant 0 : index
    %18 = vector.load %arg1[%c0_6, %c0_7] : memref<256x128xf32, #tpu.memory_space<vmem>>, vector<256x128xf32>
    tpu.vector_store %arg1[%c0_6, %c0_7], %17 {strides = array<i32>} : memref<256x128xf32, #tpu.memory_space<vmem>>, vector<256x128xf32>,
    return
  }
}

</mosaic_0001>

<llo_original>
// kernel: tpu_custom_call.1
$region0: #{tpu_custom_call.1}
  #allocation0 [shape = 'u32[]', space=smem, size = 0x4, offset = 0x4, fixed_abs, tag = 'smem constant byte address 0x4 - core index']
  #allocation1 [shape = 'u32[144,128]{1,0:T(1,128)}', space=vmem, size = 0x12000, scoped, tag = 'internal scratch']
  %s0 = inlined_call_operand.hbm [shape: f32[256,128], index: 0, kind: input, shape index: {}]
  %s1 = inlined_call_operand.hbm [shape: f32[256,128], index: 1, kind: output, shape index: {}]
  %s2 = sld [smem:[#allocation0]]
  $region18: #{tpu_custom_call.1} parent=0
    _
  %s4 = ssub.s32 1, %s2
  %s5 = scalar_select 0, %s4, %s2
  $region1: #{tpu_custom_call.1} parent=0
    #allocation2 [shape = 'u8[131072]{0}', space=vmem, size = 0x20000, scoped, tag = 'input window, operand 0, single buffered']
    #allocation3 [shape = 's32[1]{0}', space=sflag, size = 0x4, scoped, tag = 'scoped memory for tpu_custom_call.1']
    #allocation4 [shape = 's32[1]{0}', space=sflag, size = 0x4, scoped, tag = 'scoped memory for tpu_custom_call.1']
    #allocation5 [shape = 'u8[131072]{0}', space=vmem, size = 0x20000, scoped, tag = 'output window, operand 0, single buffered']
    %6 = vsyncpa [#allocation3], 0
    %7 = vsyncpa [#allocation4], 0
    // Predicated region
    $region2: #{tpu_custom_call.1} parent=1 // pred_check
      _
    $region3: #{tpu_custom_call.1} parent=1 // pred_check_branch
      %9 = sbr.rel (0) target = $region5
    $region4: #{tpu_custom_call.1} parent=1 // pred_region
      %s11 = ssub.s32 4096, 4096
      %12 = vsyncadd [#allocation3], %s11
      %s13 = sshll.u32 [#allocation2], 4
      %s14 = int_to_ptr.vmem [resolvable:$true] %s13
      %19 = dma.hbm_to_vmem [thread:$0]  %s0, 4096, %s14, [#allocation3], 128, 128, 8
    $region5: #{tpu_custom_call.1} parent=1 // pred_fallthru
      _
    // Predicated region
    $region6: #{tpu_custom_call.1} parent=1 // pred_check
      _
    $region7: #{tpu_custom_call.1} parent=1 // pred_check_branch
      %21 = sbr.rel (0) target = $region9
    $region8: #{tpu_custom_call.1} parent=1 // pred_region
      %22 = dma.done [#allocation3], 4096
    $region9: #{tpu_custom_call.1} parent=1 // pred_fallthru
      _
    %v23 = vld [vmem:[#allocation2] sm:$0xff]
    %v24 = vld [vmem:[#allocation2 + $0x8] sm:$0xff]
    %v25 = vld [vmem:[#allocation2 + $0x10] sm:$0xff]
    %v26 = vld [vmem:[#allocation2 + $0x18] sm:$0xff]
    %v27 = vld [vmem:[#allocation2 + $0x20] sm:$0xff]
    %v28 = vld [vmem:[#allocation2 + $0x28] sm:$0xff]
    %v29 = vld [vmem:[#allocation2 + $0x30] sm:$0xff]
    %v30 = vld [vmem:[#allocation2 + $0x38] sm:$0xff]
    %v31 = vld [vmem:[#allocation2 + $0x40] sm:$0xff]
    %v32 = vld [vmem:[#allocation2 + $0x48] sm:$0xff]
    %v33 = vld [vmem:[#allocation2 + $0x50] sm:$0xff]
    %v34 = vld [vmem:[#allocation2 + $0x58] sm:$0xff]
    %v35 = vld [vmem:[#allocation2 + $0x60] sm:$0xff]
    %v36 = vld [vmem:[#allocation2 + $0x68] sm:$0xff]
    %v37 = vld [vmem:[#allocation2 + $0x70] sm:$0xff]
    %v38 = vld [vmem:[#allocation2 + $0x78] sm:$0xff]
    %v39 = vld [vmem:[#allocation2 + $0x80] sm:$0xff]
    %v40 = vld [vmem:[#allocation2 + $0x88] sm:$0xff]
    %v41 = vld [vmem:[#allocation2 + $0x90] sm:$0xff]
    %v42 = vld [vmem:[#allocation2 + $0x98] sm:$0xff]
    %v43 = vld [vmem:[#allocation2 + $0xa0] sm:$0xff]
    %v44 = vld [vmem:[#allocation2 + $0xa8] sm:$0xff]
    %v45 = vld [vmem:[#allocation2 + $0xb0] sm:$0xff]
    %v46 = vld [vmem:[#allocation2 + $0xb8] sm:$0xff]
    %v47 = vld [vmem:[#allocation2 + $0xc0] sm:$0xff]
    %v48 = vld [vmem:[#allocation2 + $0xc8] sm:$0xff]
    %v49 = vld [vmem:[#allocation2 + $0xd0] sm:$0xff]
    %v50 = vld [vmem:[#allocation2 + $0xd8] sm:$0xff]
    %v51 = vld [vmem:[#allocation2 + $0xe0] sm:$0xff]
    %v52 = vld [vmem:[#allocation2 + $0xe8] sm:$0xff]
    %v53 = vld [vmem:[#allocation2 + $0xf0] sm:$0xff]
    %v54 = vld [vmem:[#allocation2 + $0xf8] sm:$0xff]
    %v55 = vadd.f32 %v23, %v24
    %v56 = vadd.f32 %v55, %v25
    %v57 = vadd.f32 %v56, %v26
    %v58 = vadd.f32 %v57, %v27
    %v59 = vadd.f32 %v58, %v28
    %v60 = vadd.f32 %v59, %v29
    %v61 = vadd.f32 %v60, %v30
    %v62 = vadd.f32 %v61, %v31
    %v63 = vadd.f32 %v62, %v32
    %v64 = vadd.f32 %v63, %v33
    %v65 = vadd.f32 %v64, %v34
    %v66 = vadd.f32 %v65, %v35
    %v67 = vadd.f32 %v66, %v36
    %v68 = vadd.f32 %v67, %v37
    %v69 = vadd.f32 %v68, %v38
    %v70 = vadd.f32 %v69, %v39
    %v71 = vadd.f32 %v70, %v40
    %v72 = vadd.f32 %v71, %v41
    %v73 = vadd.f32 %v72, %v42
    %v74 = vadd.f32 %v73, %v43
    %v75 = vadd.f32 %v74, %v44
    %v76 = vadd.f32 %v75, %v45
    %v77 = vadd.f32 %v76, %v46
    %v78 = vadd.f32 %v77, %v47
    %v79 = vadd.f32 %v78, %v48
    %v80 = vadd.f32 %v79, %v49
    %v81 = vadd.f32 %v80, %v50
    %v82 = vadd.f32 %v81, %v51
    %v83 = vadd.f32 %v82, %v52
    %v84 = vadd.f32 %v83, %v53
    %v85 = vadd.f32 %v84, %v54
    %v86 = vrot.slane %v85, 4
    %v87 = vadd.f32 %v85, %v86
    %v88 = vrot.slane %v87, 2
    %v89 = vadd.f32 %v87, %v88
    %v90 = vrot.slane %v89, 1
    %v91 = vadd.f32 %v89, %v90
    %v92 = vmul.f32 %v91, 0.00390625
    %v93 = vsub.f32 %v23, %v92
    %v94 = vsub.f32 %v24, %v92
    %v95 = vsub.f32 %v25, %v92
    %v96 = vsub.f32 %v26, %v92
    %v97 = vsub.f32 %v27, %v92
    %v98 = vsub.f32 %v28, %v92
    %v99 = vsub.f32 %v29, %v92
    %v100 = vsub.f32 %v30, %v92
    %v101 = vsub.f32 %v31, %v92
    %v102 = vsub.f32 %v32, %v92
    %v103 = vsub.f32 %v33, %v92
    %v104 = vsub.f32 %v34, %v92
    %v105 = vsub.f32 %v35, %v92
    %v106 = vsub.f32 %v36, %v92
    %v107 = vsub.f32 %v37, %v92
    %v108 = vsub.f32 %v38, %v92
    %v109 = vsub.f32 %v39, %v92
    %v110 = vsub.f32 %v40, %v92
    %v111 = vsub.f32 %v41, %v92
    %v112 = vsub.f32 %v42, %v92
    %v113 = vsub.f32 %v43, %v92
    %v114 = vsub.f32 %v44, %v92
    %v115 = vsub.f32 %v45, %v92
    %v116 = vsub.f32 %v46, %v92
    %v117 = vsub.f32 %v47, %v92
    %v118 = vsub.f32 %v48, %v92
    %v119 = vsub.f32 %v49, %v92
    %v120 = vsub.f32 %v50, %v92
    %v121 = vsub.f32 %v51, %v92
    %v122 = vsub.f32 %v52, %v92
    %v123 = vsub.f32 %v53, %v92
    %v124 = vsub.f32 %v54, %v92
    %v125 = vmul.f32 %v93, %v93
    %v126 = vmul.f32 %v94, %v94
    %v127 = vmul.f32 %v95, %v95
    %v128 = vmul.f32 %v96, %v96
    %v129 = vmul.f32 %v97, %v97
    %v130 = vmul.f32 %v98, %v98
    %v131 = vmul.f32 %v99, %v99
    %v132 = vmul.f32 %v100, %v100
    %v133 = vmul.f32 %v101, %v101
    %v134 = vmul.f32 %v102, %v102
    %v135 = vmul.f32 %v103, %v103
    %v136 = vmul.f32 %v104, %v104
    %v137 = vmul.f32 %v105, %v105
    %v138 = vmul.f32 %v106, %v106
    %v139 = vmul.f32 %v107, %v107
    %v140 = vmul.f32 %v108, %v108
    %v141 = vmul.f32 %v109, %v109
    %v142 = vmul.f32 %v110, %v110
    %v143 = vmul.f32 %v111, %v111
    %v144 = vmul.f32 %v112, %v112
    %v145 = vmul.f32 %v113, %v113
    %v146 = vmul.f32 %v114, %v114
    %v147 = vmul.f32 %v115, %v115
    %v148 = vmul.f32 %v116, %v116
    %v149 = vmul.f32 %v117, %v117
    %v150 = vmul.f32 %v118, %v118
    %v151 = vmul.f32 %v119, %v119
    %v152 = vmul.f32 %v120, %v120
    %v153 = vmul.f32 %v121, %v121
    %v154 = vmul.f32 %v122, %v122
    %v155 = vmul.f32 %v123, %v123
    %v156 = vmul.f32 %v124, %v124
    %v157 = vadd.f32 %v125, %v126
    %v158 = vadd.f32 %v157, %v127
    %v159 = vadd.f32 %v158, %v128
    %v160 = vadd.f32 %v159, %v129
    %v161 = vadd.f32 %v160, %v130
    %v162 = vadd.f32 %v161, %v131
    %v163 = vadd.f32 %v162, %v132
    %v164 = vadd.f32 %v163, %v133
    %v165 = vadd.f32 %v164, %v134
    %v166 = vadd.f32 %v165, %v135
    %v167 = vadd.f32 %v166, %v136
    %v168 = vadd.f32 %v167, %v137
    %v169 = vadd.f32 %v168, %v138
    %v170 = vadd.f32 %v169, %v139
    %v171 = vadd.f32 %v170, %v140
    %v172 = vadd.f32 %v171, %v141
    %v173 = vadd.f32 %v172, %v142
    %v174 = vadd.f32 %v173, %v143
    %v175 = vadd.f32 %v174, %v144
    %v176 = vadd.f32 %v175, %v145
    %v177 = vadd.f32 %v176, %v146
    %v178 = vadd.f32 %v177, %v147
    %v179 = vadd.f32 %v178, %v148
    %v180 = vadd.f32 %v179, %v149
    %v181 = vadd.f32 %v180, %v150
    %v182 = vadd.f32 %v181, %v151
    %v183 = vadd.f32 %v182, %v152
    %v184 = vadd.f32 %v183, %v153
    %v185 = vadd.f32 %v184, %v154
    %v186 = vadd.f32 %v185, %v155
    %v187 = vadd.f32 %v186, %v156
    %188 = vadd.xlane.f32.xlu0 %v187
    %v189 = vpop.xlane.xlu0 %188
    %v190 = vrot.slane %v189, 4
    %v191 = vadd.f32 %v189, %v190
    %v192 = vrot.slane %v191, 2
    %v193 = vadd.f32 %v191, %v192
    %v194 = vrot.slane %v193, 1
    %v195 = vadd.f32 %v193, %v194
    %s196 = vtos %v195
    %s197 = smul.f32 %s196, 0.00390625
    %s198 = sadd.f32 %s197, 1e-06
    %v199 = vstv %s198
    %v200 = vrsqrt.pop %v199
    %s201 = vtos %v200
    %v202 = vstv %s201
    %v203 = vmul.f32 %v93, %v202
    %v204 = vmul.f32 %v94, %v202
    %v205 = vmul.f32 %v95, %v202
    %v206 = vmul.f32 %v96, %v202
    %v207 = vmul.f32 %v97, %v202
    %v208 = vmul.f32 %v98, %v202
    %v209 = vmul.f32 %v99, %v202
    %v210 = vmul.f32 %v100, %v202
    %v211 = vmul.f32 %v101, %v202
    %v212 = vmul.f32 %v102, %v202
    %v213 = vmul.f32 %v103, %v202
    %v214 = vmul.f32 %v104, %v202
    %v215 = vmul.f32 %v105, %v202
    %v216 = vmul.f32 %v106, %v202
    %v217 = vmul.f32 %v107, %v202
    %v218 = vmul.f32 %v108, %v202
    %v219 = vmul.f32 %v109, %v202
    %v220 = vmul.f32 %v110, %v202
    %v221 = vmul.f32 %v111, %v202
    %v222 = vmul.f32 %v112, %v202
    %v223 = vmul.f32 %v113, %v202
    %v224 = vmul.f32 %v114, %v202
    %v225 = vmul.f32 %v115, %v202
    %v226 = vmul.f32 %v116, %v202
    %v227 = vmul.f32 %v117, %v202
    %v228 = vmul.f32 %v118, %v202
    %v229 = vmul.f32 %v119, %v202
    %v230 = vmul.f32 %v120, %v202
    %v231 = vmul.f32 %v121, %v202
    %v232 = vmul.f32 %v122, %v202
    %v233 = vmul.f32 %v123, %v202
    %v234 = vmul.f32 %v124, %v202
    %235 = vst [vmem:[#allocation5] sm:$0xff] %v203
    %236 = vst [vmem:[#allocation5 + $0x8] sm:$0xff] %v204
    %237 = vst [vmem:[#allocation5 + $0x10] sm:$0xff] %v205
    %238 = vst [vmem:[#allocation5 + $0x18] sm:$0xff] %v206
    %239 = vst [vmem:[#allocation5 + $0x20] sm:$0xff] %v207
    %240 = vst [vmem:[#allocation5 + $0x28] sm:$0xff] %v208
    %241 = vst [vmem:[#allocation5 + $0x30] sm:$0xff] %v209
    %242 = vst [vmem:[#allocation5 + $0x38] sm:$0xff] %v210
    %243 = vst [vmem:[#allocation5 + $0x40] sm:$0xff] %v211
    %244 = vst [vmem:[#allocation5 + $0x48] sm:$0xff] %v212
    %245 = vst [vmem:[#allocation5 + $0x50] sm:$0xff] %v213
    %246 = vst [vmem:[#allocation5 + $0x58] sm:$0xff] %v214
    %247 = vst [vmem:[#allocation5 + $0x60] sm:$0xff] %v215
    %248 = vst [vmem:[#allocation5 + $0x68] sm:$0xff] %v216
    %249 = vst [vmem:[#allocation5 + $0x70] sm:$0xff] %v217
    %250 = vst [vmem:[#allocation5 + $0x78] sm:$0xff] %v218
    %251 = vst [vmem:[#allocation5 + $0x80] sm:$0xff] %v219
    %252 = vst [vmem:[#allocation5 + $0x88] sm:$0xff] %v220
    %253 = vst [vmem:[#allocation5 + $0x90] sm:$0xff] %v221
    %254 = vst [vmem:[#allocation5 + $0x98] sm:$0xff] %v222
    %255 = vst [vmem:[#allocation5 + $0xa0] sm:$0xff] %v223
    %256 = vst [vmem:[#allocation5 + $0xa8] sm:$0xff] %v224
    %257 = vst [vmem:[#allocation5 + $0xb0] sm:$0xff] %v225
    %258 = vst [vmem:[#allocation5 + $0xb8] sm:$0xff] %v226
    %259 = vst [vmem:[#allocation5 + $0xc0] sm:$0xff] %v227
    %260 = vst [vmem:[#allocation5 + $0xc8] sm:$0xff] %v228
    %261 = vst [vmem:[#allocation5 + $0xd0] sm:$0xff] %v229
    %262 = vst [vmem:[#allocation5 + $0xd8] sm:$0xff] %v230
    %263 = vst [vmem:[#allocation5 + $0xe0] sm:$0xff] %v231
    %264 = vst [vmem:[#allocation5 + $0xe8] sm:$0xff] %v232
    %265 = vst [vmem:[#allocation5 + $0xf0] sm:$0xff] %v233
    %266 = vst [vmem:[#allocation5 + $0xf8] sm:$0xff] %v234
    // Predicated region
    $region10: #{tpu_custom_call.1} parent=1 // pred_check
      _
    $region11: #{tpu_custom_call.1} parent=1 // pred_check_branch
      %268 = sbr.rel (0) target = $region13
    $region12: #{tpu_custom_call.1} parent=1 // pred_region
      %s270 = ssub.s32 4096, 4096
      %271 = vsyncadd [#allocation4], %s270
      %s272 = sshll.u32 [#allocation5], 4
      %s273 = int_to_ptr.vmem [resolvable:$true] %s272
      %278 = dma.vmem_to_hbm [thread:$0]  %s273, 4096, %s1, [#allocation4], 128, 128, 8
    $region13: #{tpu_custom_call.1} parent=1 // pred_fallthru
      _
    // Predicated region
    $region14: #{tpu_custom_call.1} parent=1 // pred_check
      _
    $region15: #{tpu_custom_call.1} parent=1 // pred_check_branch
      %280 = sbr.rel (0) target = $region17
    $region16: #{tpu_custom_call.1} parent=1 // pred_region
      %281 = dma.done [#allocation4], 4096
    $region17: #{tpu_custom_call.1} parent=1 // pred_fallthru
      _
    %282 = vsyncpa [#allocation3], 1
    %283 = vsyncpa [#allocation4], 1

</llo_original>
